<compile_context>
chip_gen: v7x
topology: tpu7x:2x2x1
jax: 0.10.0
libtpu: 0.0.40
codegen_flags: <defaults>
</compile_context>

<pallas_src>
import math
from collections import namedtuple

import jax
import jax.numpy as jnp
from jax import lax
from jax.experimental import pallas as pl
from jax.experimental.pallas import tpu as pltpu

ForwardOutput = namedtuple("ForwardOutput", ["q_value"])

LANE = 128
# A @ B^T: contract the last dim of both operands (feature axis).
_NT_DIMS = (((1,), (1,)), ((), ()))


def _ceil_to(x, m):
    return -(-x // m) * m


def qnetwork_kernel(s_ref, a_ref, w1s_ref, w1a_ref, b1_ref, w2_ref, b2_ref,
                    q_ref):
    # fc1, feature-major result: (H, TB) with the batch axis on the 128 lanes.
    # Two small MXU dots (K = state_dim and K = action_dim) replace the
    # wrapper-side concat; A @ B^T dimension_numbers avoid any explicit
    # transpose of the big (TB, D) activation tiles.
    h = lax.dot_general(w1s_ref[...], s_ref[...], _NT_DIMS,
                        preferred_element_type=jnp.float32)
    h += lax.dot_general(w1a_ref[...], a_ref[...], _NT_DIMS,
                         preferred_element_type=jnp.float32)
    h = jnp.maximum(h + b1_ref[...], 0.0)          # bias (H, 1) + ReLU on VPU

    # fc2: VPU multiply by the (H, 1) weight column, then a sublane reduce
    # over the hidden axis (XLU slot) -> lane-dense (1, TB) output.
    q = jnp.sum(h * w2_ref[...], axis=0, keepdims=True)
    q_ref[...] = (q + b2_ref[0, 0]).astype(q_ref.dtype)   # scalar bias (SMEM)


def _choose_batch_tile(batch, max_tile):
    """Pick a lane-aligned batch tile; keep >= 2 grid steps when possible so
    the 'parallel' grid axis shards across both v7x TensorCores."""
    max_tile = max(LANE, (max_tile // LANE) * LANE)
    b_lanes = _ceil_to(batch, LANE)
    if b_lanes <= max_tile:
        if b_lanes >= 2 * LANE:
            tb = _ceil_to(b_lanes // 2, LANE)      # split for megacore
        else:
            tb = b_lanes                            # single tiny tile
    else:
        tb = max_tile                               # >= 2 tiles automatically
    num_tiles = -(-batch // tb)
    return tb, num_tiles


def qnetwork_forward(state, action, params, *, batch_tile=4096,
                     input_dtype=jnp.float32, use_pallas=None):
    """Pallas implementation of QNetwork.forward.

    params = (w1, b1, w2, b2) with PyTorch-style layouts:
      w1: (H, Ds+Da) (fc1.weight), b1: (H, 1), w2: (H, 1) (fc2.weight^T),
      b2: (1, 1)
    """
    w1, b1, w2, b2 = params
    B, Ds = state.shape
    Da = action.shape[1]
    H = w1.shape[0]

    if use_pallas is None:
        # Tiny batches are dominated by fixed launch/step overhead; let XLA
        # fuse them.  The Pallas path pays off when streaming large batches.
        use_pallas = B >= 1024
    if not use_pallas:
        x = jnp.concatenate([state, action], axis=1)
        h = jnp.maximum(x @ w1.T + b1[:, 0], 0.0)
        return ForwardOutput(q_value=h @ w2 + b2[0])

    # Split fc1.weight by input block so no concatenation of activations is
    # ever materialized (these are tiny weight slices).
    w1s = w1[:, :Ds]
    w1a = w1[:, Ds:]

    # Optional bf16 input streams (halves HBM bytes of the dominant streams;
    # breaks the 1e-5 parity assert, so off by default).  Ideally the caller
    # already provides bf16 activations so this cast is free.
    if input_dtype != jnp.float32:
        state, action = state.astype(input_dtype), action.astype(input_dtype)
        w1s, w1a = w1s.astype(input_dtype), w1a.astype(input_dtype)

    tb, num_tiles = _choose_batch_tile(B, batch_tile)
    b_out = num_tiles * tb   # output is padded to a whole number of tiles

    grid_spec = pltpu.PrefetchScalarGridSpec(
        num_scalar_prefetch=0,
        grid=(num_tiles,),
        in_specs=[
            # Activations stream in TB-row tiles (auto double-buffered);
            # the final tile may be ragged -> garbage columns are discarded.
            pl.BlockSpec((tb, Ds), lambda i: (i, 0)),            # state
            pl.BlockSpec((tb, Da), lambda i: (i, 0)),            # action
            # Weights/biases: constant index_map -> VMEM-resident.
            pl.BlockSpec((H, Ds), lambda i: (0, 0)),             # W1[:, :Ds]
            pl.BlockSpec((H, Da), lambda i: (0, 0)),             # W1[:, Ds:]
            pl.BlockSpec((H, 1), lambda i: (0, 0)),              # b1
            pl.BlockSpec((H, 1), lambda i: (0, 0)),              # w2
            pl.BlockSpec(memory_space=pltpu.MemorySpace.SMEM),   # b2 scalar
        ],
        out_specs=pl.BlockSpec((1, tb), lambda i: (0, i)),       # lane-dense
    )

    flops = b_out * (2 * H * (Ds + Da) + 4 * H)
    bytes_accessed = 4 * (B * (Ds + Da) + H * (Ds + Da) + 2 * H + 1 + b_out)

    q_rows = pl.pallas_call(
        qnetwork_kernel,
        out_shape=jax.ShapeDtypeStruct((1, b_out), jnp.float32),
        grid_spec=grid_spec,
        compiler_params=pltpu.CompilerParams(
            dimension_semantics=("parallel",)),                  # v7x megacore
        cost_estimate=pl.CostEstimate(
            flops=flops, transcendentals=0, bytes_accessed=bytes_accessed),
    )(state, action, w1s, w1a, b1, w2, b2)

    q = q_rows[0, :B].reshape(B, 1)
    return ForwardOutput(q_value=q)


def init_params(key, state_dim, action_dim, hidden_dim):
    """Mirror torch.nn.Linear default init (uniform +-1/sqrt(fan_in))."""
    input_dim = state_dim + action_dim
    k1, k2, k3, k4 = jax.random.split(key, 4)

    bound1 = 1.0 / math.sqrt(input_dim)
    w1 = jax.random.uniform(k1, (hidden_dim, input_dim), jnp.float32,
                            minval=-bound1, maxval=bound1)      # fc1.weight
    b1 = jax.random.uniform(k2, (hidden_dim, 1), jnp.float32,
                            minval=-bound1, maxval=bound1)      # fc1.bias
    bound2 = 1.0 / math.sqrt(hidden_dim)
    w2 = jax.random.uniform(k3, (hidden_dim, 1), jnp.float32,
                            minval=-bound2, maxval=bound2)      # fc2.weight^T
    b2 = jax.random.uniform(k4, (1, 1), jnp.float32,
                            minval=-bound2, maxval=bound2)      # fc2.bias
    return w1, b1, w2, b2


def reference_forward(state, action, params):
    """Pure-JAX reference matching the PyTorch module."""
    w1, b1, w2, b2 = params
    x = jnp.concatenate([state, action], axis=1)
    h = jnp.maximum(x @ w1.T + b1[:, 0], 0.0)
    return h @ w2 + b2[0]


if __name__ == "__main__":
    state_dim, action_dim, hidden_dim = 12, 4, 32
    key = jax.random.PRNGKey(0)
    k_state, k_action, k_params = jax.random.split(key, 3)
    params = init_params(k_params, state_dim, action_dim, hidden_dim)

    # 1) Small-batch check (single ragged tile; Pallas path forced so the
    #    kernel is actually exercised — auto-dispatch would pick XLA here).
    B = 8
    state = jax.random.normal(k_state, (B, state_dim), jnp.float32)
    action = jax.random.normal(k_action, (B, action_dim), jnp.float32)
    fwd = jax.jit(lambda s, a: qnetwork_forward(s, a, params, use_pallas=True))
    q = jax.block_until_ready(fwd(state, action).q_value)
    ref = reference_forward(state, action, params)
    assert q.shape == (B, 1), q.shape
    assert jnp.allclose(q, ref, atol=1e-5, rtol=1e-5), "mismatch vs reference"

    # 2) Multi-tile ragged check (2 grid steps -> both TensorCores on v7x).
    B2 = 300
    state2 = jax.random.normal(k_state, (B2, state_dim), jnp.float32)
    action2 = jax.random.normal(k_action, (B2, action_dim), jnp.float32)
    fwd2 = jax.jit(lambda s, a: qnetwork_forward(s, a, params, use_pallas=True))
    q2 = jax.block_until_ready(fwd2(state2, action2).q_value)
    ref2 = reference_forward(state2, action2, params)
    assert q2.shape == (B2, 1), q2.shape
    assert jnp.allclose(q2, ref2, atol=1e-5, rtol=1e-5), "mismatch (multi-tile)"

    print("KERNEL_OK")
</pallas_src>

<mosaic_0001>
module attributes {stable_mosaic.version = 11 : i64} {
  func.func @qnetwork_kernel(%arg0: i32, %arg1: memref<128x12xf32, #tpu.memory_space<vmem>>, %arg2: memref<128x4xf32, #tpu.memory_space<vmem>>, %arg3: memref<32x12xf32, #tpu.memory_space<vmem>>, %arg4: memref<32x4xf32, #tpu.memory_space<vmem>>, %arg5: memref<32x1xf32, #tpu.memory_space<vmem>>, %arg6: memref<32x1xf32, #tpu.memory_space<vmem>>, %arg7: memref<1x1xf32, #tpu.memory_space<smem>>, %arg8: memref<1x128xf32, #tpu.memory_space<vmem>>) attributes {dimension_semantics = [#tpu.dimension_semantics<parallel>], iteration_bounds = array<i64: 1>, scalar_prefetch = 0 : i64, scratch_operands = 0 : i64, tpu.core_type = #tpu.core_type<tc>, window_params = [{transform_indices = @transform_0, window_bounds = array<i64: 128, 12>}, {transform_indices = @transform_1, window_bounds = array<i64: 128, 4>}, {pipeline_mode = #tpu.pipeline_mode<synchronous>, transform_indices = @transform_2, window_bounds = array<i64: 32, 12>}, {pipeline_mode = #tpu.pipeline_mode<synchronous>, transform_indices = @transform_3, window_bounds = array<i64: 32, 4>}, {pipeline_mode = #tpu.pipeline_mode<synchronous>, transform_indices = @transform_4, window_bounds = array<i64: 32, 1>}, {pipeline_mode = #tpu.pipeline_mode<synchronous>, transform_indices = @transform_5, window_bounds = array<i64: 32, 1>}, {transform_indices = @transform_6, window_bounds = array<i64: 1, 1>}, {transform_indices = @transform_7, window_bounds = array<i64: 1, 128>}]} {
    %c0 = arith.constant 0 : index
    %c0_0 = arith.constant 0 : index
    %0 = vector.load %arg3[%c0, %c0_0] : memref<32x12xf32, #tpu.memory_space<vmem>>, vector<32x12xf32>
    %c0_1 = arith.constant 0 : index
    %c0_2 = arith.constant 0 : index
    %1 = vector.load %arg1[%c0_1, %c0_2] : memref<128x12xf32, #tpu.memory_space<vmem>>, vector<128x12xf32>
    %cst = arith.constant dense<0.000000e+00> : vector<32x128xf32>
    %2 = tpu.matmul %0, %1, %cst {dimension_numbers = #tpu.dot_dimension_numbers<[1], [1], [0], [0], [0, 0, 1, 0], [], []>} : vector<32x12xf32>, vector<128x12xf32>, vector<32x128xf32> -> vector<32x128xf32>
    %c0_3 = arith.constant 0 : index
    %c0_4 = arith.constant 0 : index
    %3 = vector.load %arg4[%c0_3, %c0_4] : memref<32x4xf32, #tpu.memory_space<vmem>>, vector<32x4xf32>
    %c0_5 = arith.constant 0 : index
    %c0_6 = arith.constant 0 : index
    %4 = vector.load %arg2[%c0_5, %c0_6] : memref<128x4xf32, #tpu.memory_space<vmem>>, vector<128x4xf32>
    %cst_7 = arith.constant dense<0.000000e+00> : vector<32x128xf32>
    %5 = tpu.matmul %3, %4, %cst_7 {dimension_numbers = #tpu.dot_dimension_numbers<[1], [1], [0], [0], [0, 0, 1, 0], [], []>} : vector<32x4xf32>, vector<128x4xf32>, vector<32x128xf32> -> vector<32x128xf32>
    %6 = arith.addf %2, %5 : vector<32x128xf32>
    %c0_8 = arith.constant 0 : index
    %c0_9 = arith.constant 0 : index
    %7 = vector.load %arg5[%c0_8, %c0_9] : memref<32x1xf32, #tpu.memory_space<vmem>>, vector<32x1xf32>
    %8 = vector.broadcast %7 : vector<32x1xf32> to vector<32x128xf32>
    %9 = arith.addf %6, %8 : vector<32x128xf32>
    %cst_10 = arith.constant 0.000000e+00 : f32
    %10 = vector.broadcast %cst_10 : f32 to vector<32x128xf32>
    %11 = arith.maximumf %9, %10 : vector<32x128xf32>
    %c0_11 = arith.constant 0 : index
    %c0_12 = arith.constant 0 : index
    %12 = vector.load %arg6[%c0_11, %c0_12] : memref<32x1xf32, #tpu.memory_space<vmem>>, vector<32x1xf32>
    %13 = vector.broadcast %12 : vector<32x1xf32> to vector<32x128xf32>
    %14 = arith.mulf %11, %13 : vector<32x128xf32>
    %cst_13 = arith.constant dense<0.000000e+00> : vector<128xf32>
    %15 = vector.multi_reduction <add>, %14, %cst_13 [0] : vector<32x128xf32> to vector<128xf32>
    %16 = vector.shape_cast %15 : vector<128xf32> to vector<1x128xf32>
    %c0_14 = arith.constant 0 : index
    %c0_15 = arith.constant 0 : index
    %17 = memref.load %arg7[%c0_14, %c0_15] : memref<1x1xf32, #tpu.memory_space<smem>>
    %18 = vector.broadcast %17 : f32 to vector<1x128xf32>
    %19 = arith.addf %16, %18 : vector<1x128xf32>
    %c0_16 = arith.constant 0 : index
    %c0_17 = arith.constant 0 : index
    %20 = vector.load %arg8[%c0_16, %c0_17] : memref<1x128xf32, #tpu.memory_space<vmem>>, vector<1x128xf32>
    tpu.vector_store %arg8[%c0_16, %c0_17], %19 {strides = array<i32>} : memref<1x128xf32, #tpu.memory_space<vmem>>, vector<1x128xf32>,
    return
  }
  func.func @transform_0(%arg0: i32) -> (i32, i32) {
    %c0_i32 = arith.constant 0 : i32
    %c0_i32_0 = arith.constant 0 : i32
    return %arg0, %c0_i32 : i32, i32
  }
  func.func @transform_1(%arg0: i32) -> (i32, i32) {
    %c0_i32 = arith.constant 0 : i32
    %c0_i32_0 = arith.constant 0 : i32
    return %arg0, %c0_i32 : i32, i32
  }
  func.func @transform_2(%arg0: i32) -> (i32, i32) {
    %c0_i32 = arith.constant 0 : i32
    %c0_i32_0 = arith.constant 0 : i32
    %c0_i32_1 = arith.constant 0 : i32
    return %c0_i32, %c0_i32_0 : i32, i32
  }
  func.func @transform_3(%arg0: i32) -> (i32, i32) {
    %c0_i32 = arith.constant 0 : i32
    %c0_i32_0 = arith.constant 0 : i32
    %c0_i32_1 = arith.constant 0 : i32
    return %c0_i32, %c0_i32_0 : i32, i32
  }
  func.func @transform_4(%arg0: i32) -> (i32, i32) {
    %c0_i32 = arith.constant 0 : i32
    %c0_i32_0 = arith.constant 0 : i32
    %c0_i32_1 = arith.constant 0 : i32
    return %c0_i32, %c0_i32_0 : i32, i32
  }
  func.func @transform_5(%arg0: i32) -> (i32, i32) {
    %c0_i32 = arith.constant 0 : i32
    %c0_i32_0 = arith.constant 0 : i32
    %c0_i32_1 = arith.constant 0 : i32
    return %c0_i32, %c0_i32_0 : i32, i32
  }
  func.func @transform_6(%arg0: i32) -> (i32, i32) {
    %c0_i32 = arith.constant 0 : i32
    %c0_i32_0 = arith.constant 0 : i32
    %c0_i32_1 = arith.constant 0 : i32
    return %c0_i32, %c0_i32_0 : i32, i32
  }
  func.func @transform_7(%arg0: i32) -> (i32, i32) {
    %c0_i32 = arith.constant 0 : i32
    %c0_i32_0 = arith.constant 0 : i32
    return %c0_i32, %arg0 : i32, i32
  }
}

</mosaic_0001>

<llo_original>
// kernel: _lambda_.1
$region0: #{_lambda_.1}
  #allocation0 [shape = 'u32[]', space=smem, size = 0x4, offset = 0x4, fixed_abs, tag = 'smem constant byte address 0x4 - core index']
  #allocation1 [shape = 'u32[144,128]{1,0:T(1,128)}', space=vmem, size = 0x12000, scoped, tag = 'internal scratch']
  #allocation2 [shape = 'f32[1,1]{1,0:T(1,128)S(6)}', space=smem, size = 0x200, scoped, tag = 'scoped memory for _lambda_.1']
  %s0 = inlined_call_operand.vmem [shape: f32[8,12], index: 0, kind: input, shape index: {}]
  %s1 = inlined_call_operand.vmem [shape: f32[8,4], index: 1, kind: input, shape index: {}]
  %s2 = inlined_call_operand.hbm [shape: f32[32,12], index: 2, kind: input, shape index: {}]
  %s3 = inlined_call_operand.hbm [shape: f32[32,4], index: 3, kind: input, shape index: {}]
  %s4 = inlined_call_operand.hbm [shape: f32[32,1], index: 4, kind: input, shape index: {}]
  %s5 = inlined_call_operand.hbm [shape: f32[32,1], index: 5, kind: input, shape index: {}]
  %s6 = inlined_call_operand.<no memory space> [shape: f32[1,1], index: 6, kind: input, shape index: {}]
  %s7 = inlined_call_operand.vmem [shape: f32[1,128], index: 7, kind: output, shape index: {}]
  %s8 = sld [smem:[#allocation0]]
  $region54: #{_lambda_.1} parent=0
    _
  %s10 = ssub.s32 1, %s8
  %s11 = scalar_select 0, %s10, %s8
  %12 = sst [smem:[#allocation2]] %s6
  $region1: #{_lambda_.1} parent=0
    #allocation3 [shape = 'u8[16384]{0}', space=vmem, size = 0x4000, scoped, tag = 'input window, operand 2, single buffered']
    #allocation4 [shape = 's32[1]{0}', space=sflag, size = 0x4, scoped, tag = 'scoped memory for _lambda_.1']
    #allocation5 [shape = 'u8[16384]{0}', space=vmem, size = 0x4000, scoped, tag = 'input window, operand 3, single buffered']
    #allocation6 [shape = 's32[1]{0}', space=sflag, size = 0x4, scoped, tag = 'scoped memory for _lambda_.1']
    #allocation7 [shape = 'u8[16384]{0}', space=vmem, size = 0x4000, scoped, tag = 'input window, operand 4, single buffered']
    #allocation8 [shape = 'u8[16384]{0}', space=vmem, size = 0x4000, scoped, tag = 'input window, operand 5, single buffered']
    #allocation9 [shape = 's32[1]{0}', space=sflag, size = 0x4, scoped, tag = 'scoped memory for _lambda_.1']
    %13 = vsyncpa [#allocation4], 0
    %14 = vsyncpa [#allocation6], 0
    %15 = vsyncpa [#allocation9], 0
    // Predicated region
    $region2: #{_lambda_.1} parent=1 // pred_check
      _
    $region3: #{_lambda_.1} parent=1 // pred_check_branch
      %17 = sbr.rel (0) target = $region5
    $region4: #{_lambda_.1} parent=1 // pred_region
      _
    $region5: #{_lambda_.1} parent=1 // pred_fallthru
      _
    // Predicated region
    $region6: #{_lambda_.1} parent=1 // pred_check
      _
    $region7: #{_lambda_.1} parent=1 // pred_check_branch
      %19 = sbr.rel (0) target = $region9
    $region8: #{_lambda_.1} parent=1 // pred_region
      _
    $region9: #{_lambda_.1} parent=1 // pred_fallthru
      _
    // Predicated region
    $region10: #{_lambda_.1} parent=1 // pred_check
      _
    $region11: #{_lambda_.1} parent=1 // pred_check_branch
      %21 = sbr.rel (0) target = $region13
    $region12: #{_lambda_.1} parent=1 // pred_region
      %s23 = ssub.s32 512, 512
      %24 = vsyncadd [#allocation4], %s23
      %s25 = sshll.u32 [#allocation3], 4
      %s26 = int_to_ptr.vmem [resolvable:$true] %s25
      %31 = dma.hbm_to_vmem [thread:$0]  %s2, 512, %s26, [#allocation4], 128, 128, 8
    $region13: #{_lambda_.1} parent=1 // pred_fallthru
      _
    // Predicated region
    $region14: #{_lambda_.1} parent=1 // pred_check
      _
    $region15: #{_lambda_.1} parent=1 // pred_check_branch
      %33 = sbr.rel (0) target = $region17
    $region16: #{_lambda_.1} parent=1 // pred_region
      %s35 = ssub.s32 512, 512
      %36 = vsyncadd [#allocation6], %s35
      %s37 = sshll.u32 [#allocation5], 4
      %s38 = int_to_ptr.vmem [resolvable:$true] %s37
      %43 = dma.hbm_to_vmem [thread:$0]  %s3, 512, %s38, [#allocation6], 128, 128, 8
    $region17: #{_lambda_.1} parent=1 // pred_fallthru
      _
    // Predicated region
    $region18: #{_lambda_.1} parent=1 // pred_check
      _
    $region19: #{_lambda_.1} parent=1 // pred_check_branch
      %45 = sbr.rel (0) target = $region21
    $region20: #{_lambda_.1} parent=1 // pred_region
      %s47 = ssub.s32 512, 512
      %48 = vsyncadd [#allocation6], %s47
      %s49 = sshll.u32 [#allocation7], 4
      %s50 = int_to_ptr.vmem [resolvable:$true] %s49
      %55 = dma.hbm_to_vmem [thread:$0]  %s4, 512, %s50, [#allocation6], 128, 128, 8
    $region21: #{_lambda_.1} parent=1 // pred_fallthru
      _
    // Predicated region
    $region22: #{_lambda_.1} parent=1 // pred_check
      _
    $region23: #{_lambda_.1} parent=1 // pred_check_branch
      %57 = sbr.rel (0) target = $region25
    $region24: #{_lambda_.1} parent=1 // pred_region
      %s59 = ssub.s32 512, 512
      %60 = vsyncadd [#allocation9], %s59
      %s61 = sshll.u32 [#allocation8], 4
      %s62 = int_to_ptr.vmem [resolvable:$true] %s61
      %67 = dma.hbm_to_vmem [thread:$0]  %s5, 512, %s62, [#allocation9], 128, 128, 8
    $region25: #{_lambda_.1} parent=1 // pred_fallthru
      _
    // Predicated region
    $region26: #{_lambda_.1} parent=1 // pred_check
      _
    $region27: #{_lambda_.1} parent=1 // pred_check_branch
      %69 = sbr.rel (0) target = $region29
    $region28: #{_lambda_.1} parent=1 // pred_region
      _
    $region29: #{_lambda_.1} parent=1 // pred_fallthru
      _
    // Predicated region
    $region30: #{_lambda_.1} parent=1 // pred_check
      _
    $region31: #{_lambda_.1} parent=1 // pred_check_branch
      %71 = sbr.rel (0) target = $region33
    $region32: #{_lambda_.1} parent=1 // pred_region
      %72 = dma.done [#allocation4], 512
    $region33: #{_lambda_.1} parent=1 // pred_fallthru
      _
    // Predicated region
    $region34: #{_lambda_.1} parent=1 // pred_check
      _
    $region35: #{_lambda_.1} parent=1 // pred_check_branch
      %74 = sbr.rel (0) target = $region37
    $region36: #{_lambda_.1} parent=1 // pred_region
      %75 = dma.done [#allocation6], 512
    $region37: #{_lambda_.1} parent=1 // pred_fallthru
      _
    // Predicated region
    $region38: #{_lambda_.1} parent=1 // pred_check
      _
    $region39: #{_lambda_.1} parent=1 // pred_check_branch
      %77 = sbr.rel (0) target = $region41
    $region40: #{_lambda_.1} parent=1 // pred_region
      %78 = dma.done [#allocation6], 512
    $region41: #{_lambda_.1} parent=1 // pred_fallthru
      _
    // Predicated region
    $region42: #{_lambda_.1} parent=1 // pred_check
      _
    $region43: #{_lambda_.1} parent=1 // pred_check_branch
      %80 = sbr.rel (0) target = $region45
    $region44: #{_lambda_.1} parent=1 // pred_region
      %81 = dma.done [#allocation9], 512
    $region45: #{_lambda_.1} parent=1 // pred_fallthru
      _
    %v82 = vld [vmem:[#allocation3] sm:$0xff]
    %v83 = vld [vmem:[#allocation3 + $0x8] sm:$0xff]
    %v84 = vld [vmem:[#allocation3 + $0x10] sm:$0xff]
    %v85 = vld [vmem:[#allocation3 + $0x18] sm:$0xff]
    %v86 = vld [vmem:[%s0] sm:$0xff]
    %v87 = vld [vmem:[%s0 + $0x8] sm:$0xff]
    %v88 = vld [vmem:[%s0 + $0x10] sm:$0xff]
    %v89 = vld [vmem:[%s0 + $0x18] sm:$0xff]
    %v90 = vld [vmem:[%s0 + $0x20] sm:$0xff]
    %v91 = vld [vmem:[%s0 + $0x28] sm:$0xff]
    %v92 = vld [vmem:[%s0 + $0x30] sm:$0xff]
    %v93 = vld [vmem:[%s0 + $0x38] sm:$0xff]
    %v94 = vld [vmem:[%s0 + $0x40] sm:$0xff]
    %v95 = vld [vmem:[%s0 + $0x48] sm:$0xff]
    %v96 = vld [vmem:[%s0 + $0x50] sm:$0xff]
    %v97 = vld [vmem:[%s0 + $0x58] sm:$0xff]
    %v98 = vld [vmem:[%s0 + $0x60] sm:$0xff]
    %v99 = vld [vmem:[%s0 + $0x68] sm:$0xff]
    %v100 = vld [vmem:[%s0 + $0x70] sm:$0xff]
    %v101 = vld [vmem:[%s0 + $0x78] sm:$0xff]
    %v102 = vld [vmem:[#allocation5] sm:$0xff]
    %v103 = vld [vmem:[#allocation5 + $0x8] sm:$0xff]
    %v104 = vld [vmem:[#allocation5 + $0x10] sm:$0xff]
    %v105 = vld [vmem:[#allocation5 + $0x18] sm:$0xff]
    %v106 = vld [vmem:[%s1] sm:$0xff]
    %v107 = vld [vmem:[%s1 + $0x8] sm:$0xff]
    %v108 = vld [vmem:[%s1 + $0x10] sm:$0xff]
    %v109 = vld [vmem:[%s1 + $0x18] sm:$0xff]
    %v110 = vld [vmem:[%s1 + $0x20] sm:$0xff]
    %v111 = vld [vmem:[%s1 + $0x28] sm:$0xff]
    %v112 = vld [vmem:[%s1 + $0x30] sm:$0xff]
    %v113 = vld [vmem:[%s1 + $0x38] sm:$0xff]
    %v114 = vld [vmem:[%s1 + $0x40] sm:$0xff]
    %v115 = vld [vmem:[%s1 + $0x48] sm:$0xff]
    %v116 = vld [vmem:[%s1 + $0x50] sm:$0xff]
    %v117 = vld [vmem:[%s1 + $0x58] sm:$0xff]
    %v118 = vld [vmem:[%s1 + $0x60] sm:$0xff]
    %v119 = vld [vmem:[%s1 + $0x68] sm:$0xff]
    %v120 = vld [vmem:[%s1 + $0x70] sm:$0xff]
    %v121 = vld [vmem:[%s1 + $0x78] sm:$0xff]
    %vm122 = vcmask 31744
    %v124 = vsel %vm122, %v102, 0
    %v127 = vsel %vm122, %v103, 0
    %v130 = vsel %vm122, %v104, 0
    %v133 = vsel %vm122, %v105, 0
    %v136 = vsel %vm122, %v106, 0
    %v139 = vsel %vm122, %v107, 0
    %v142 = vsel %vm122, %v108, 0
    %v145 = vsel %vm122, %v109, 0
    %v148 = vsel %vm122, %v110, 0
    %v151 = vsel %vm122, %v111, 0
    %v154 = vsel %vm122, %v112, 0
    %v157 = vsel %vm122, %v113, 0
    %v160 = vsel %vm122, %v114, 0
    %v163 = vsel %vm122, %v115, 0
    %v166 = vsel %vm122, %v116, 0
    %v169 = vsel %vm122, %v117, 0
    %v172 = vsel %vm122, %v118, 0
    %v175 = vsel %vm122, %v119, 0
    %v178 = vsel %vm122, %v120, 0
    %v181 = vsel %vm122, %v121, 0
    %183 = vmatprep.subr.mxu0 0.0
    %184 = vmatpush1.xpose.msra.mxu0 %v136
    %185 = vmatprep.subr.mxu0 0.0
    %186 = vmatpush1.xpose.msra.mxu0 %v139
    %187 = vmatprep.subr.mxu0 0.0
    %188 = vmatpush1.xpose.msra.mxu0 %v142
    %189 = vmatprep.subr.mxu0 0.0
    %190 = vmatpush1.xpose.msra.mxu0 %v145
    %191 = vmatprep.subr.mxu0 0.0
    %192 = vmatpush1.xpose.msra.mxu0 %v148
    %193 = vmatprep.subr.mxu0 0.0
    %194 = vmatpush1.xpose.msra.mxu0 %v151
    %195 = vmatprep.subr.mxu0 0.0
    %196 = vmatpush1.xpose.msra.mxu0 %v154
    %197 = vmatprep.subr.mxu0 0.0
    %198 = vmatpush1.xpose.msra.mxu0 %v157
    %199 = vmatprep.subr.mxu0 0.0
    %200 = vmatpush1.xpose.msra.mxu0 %v160
    %201 = vmatprep.subr.mxu0 0.0
    %202 = vmatpush1.xpose.msra.mxu0 %v163
    %203 = vmatprep.subr.mxu0 0.0
    %204 = vmatpush1.xpose.msra.mxu0 %v166
    %205 = vmatprep.subr.mxu0 0.0
    %206 = vmatpush1.xpose.msra.mxu0 %v169
    %207 = vmatprep.subr.mxu0 0.0
    %208 = vmatpush1.xpose.msra.mxu0 %v172
    %209 = vmatprep.subr.mxu0 0.0
    %210 = vmatpush1.xpose.msra.mxu0 %v175
    %211 = vmatprep.subr.mxu0 0.0
    %212 = vmatpush1.xpose.msra.mxu0 %v178
    %213 = vmatprep.subr.mxu0 0.0
    %214 = vmatpush1.xpose.msra.mxu0 %v181
    %215 = vmatprep.subr.mxu0 0.0
    %216 = vmatpush1.xpose.msra.mxu0 0.0
    %217 = vmatprep.subr.mxu0 0.0
    %218 = vmatpush1.xpose.msra.mxu0 0.0
    %219 = vmatprep.subr.mxu0 0.0
    %220 = vmatpush1.xpose.msra.mxu0 0.0
    %221 = vmatprep.subr.mxu0 0.0
    %222 = vmatpush1.xpose.msra.mxu0 0.0
    %223 = vmatprep.subr.mxu0 0.0
    %224 = vmatpush1.xpose.msra.mxu0 0.0
    %225 = vmatprep.subr.mxu0 0.0
    %226 = vmatpush1.xpose.msra.mxu0 0.0
    %227 = vmatprep.subr.mxu0 0.0
    %228 = vmatpush1.xpose.msra.mxu0 0.0
    %229 = vmatprep.subr.mxu0 0.0
    %230 = vmatpush1.xpose.msra.mxu0 0.0
    %231 = vmatprep.subr.mxu0 0.0
    %232 = vmatpush1.xpose.msra.mxu0 0.0
    %233 = vmatprep.subr.mxu0 0.0
    %234 = vmatpush1.xpose.msra.mxu0 0.0
    %235 = vmatprep.subr.mxu0 0.0
    %236 = vmatpush1.xpose.msra.mxu0 0.0
    %237 = vmatprep.subr.mxu0 0.0
    %238 = vmatpush1.xpose.msra.mxu0 0.0
    %239 = vmatprep.subr.mxu0 0.0
    %240 = vmatpush1.xpose.msra.mxu0 0.0
    %241 = vmatprep.subr.mxu0 0.0
    %242 = vmatpush1.xpose.msra.mxu0 0.0
    %243 = vmatprep.subr.mxu0 0.0
    %244 = vmatpush1.xpose.msra.mxu0 0.0
    %245 = vmatprep.subr.mxu0 0.0
    %246 = vmatpush1.xpose.msra.mxu0 0.0
    %247 = vmatprep.mubr.f32.mxu0 0.0
    %248 = vmatmul.mubr.f32.gmra.mrb[0].mxu0 %v124
    %v249 = vpop.f32.mrb[0].mxu0
    %v250 = vadd.f32 0.0, %v249
    %v251 = vpop.f32.mrb[0].mxu0
    %252 = vmatprep.mubr.f32.mxu0 0.0
    %253 = vmatmul.mubr.f32.gmra.mrb[0].mxu0 %v127
    %v254 = vpop.f32.mrb[0].mxu0
    %v255 = vadd.f32 0.0, %v254
    %v256 = vpop.f32.mrb[0].mxu0
    %257 = vmatprep.mubr.f32.mxu0 0.0
    %258 = vmatmul.mubr.f32.gmra.mrb[0].mxu0 %v130
    %v259 = vpop.f32.mrb[0].mxu0
    %v260 = vadd.f32 0.0, %v259
    %v261 = vpop.f32.mrb[0].mxu0
    %262 = vmatprep.mubr.f32.mxu0 0.0
    %263 = vmatmul.mubr.f32.gmra.mrb[0].mxu0 %v133
    %v264 = vpop.f32.mrb[0].mxu0
    %v265 = vadd.f32 0.0, %v264
    %v266 = vpop.f32.mrb[0].mxu0
    %267 = vdwg.mxu0
    %vm268 = vcmask 97280
    %v270 = vsel %vm268, %v82, 0
    %v273 = vsel %vm268, %v83, 0
    %v276 = vsel %vm268, %v84, 0
    %v279 = vsel %vm268, %v85, 0
    %v282 = vsel %vm268, %v86, 0
    %v285 = vsel %vm268, %v87, 0
    %v288 = vsel %vm268, %v88, 0
    %v291 = vsel %vm268, %v89, 0
    %v294 = vsel %vm268, %v90, 0
    %v297 = vsel %vm268, %v91, 0
    %v300 = vsel %vm268, %v92, 0
    %v303 = vsel %vm268, %v93, 0
    %v306 = vsel %vm268, %v94, 0
    %v309 = vsel %vm268, %v95, 0
    %v312 = vsel %vm268, %v96, 0
    %v315 = vsel %vm268, %v97, 0
    %v318 = vsel %vm268, %v98, 0
    %v321 = vsel %vm268, %v99, 0
    %v324 = vsel %vm268, %v100, 0
    %v327 = vsel %vm268, %v101, 0
    %329 = vmatprep.subr.mxu0 0.0
    %330 = vmatpush1.xpose.msra.mxu0 %v282
    %331 = vmatprep.subr.mxu0 0.0
    %332 = vmatpush1.xpose.msra.mxu0 %v285
    %333 = vmatprep.subr.mxu0 0.0
    %334 = vmatpush1.xpose.msra.mxu0 %v288
    %335 = vmatprep.subr.mxu0 0.0
    %336 = vmatpush1.xpose.msra.mxu0 %v291
    %337 = vmatprep.subr.mxu0 0.0
    %338 = vmatpush1.xpose.msra.mxu0 %v294
    %339 = vmatprep.subr.mxu0 0.0
    %340 = vmatpush1.xpose.msra.mxu0 %v297
    %341 = vmatprep.subr.mxu0 0.0
    %342 = vmatpush1.xpose.msra.mxu0 %v300
    %343 = vmatprep.subr.mxu0 0.0
    %344 = vmatpush1.xpose.msra.mxu0 %v303
    %345 = vmatprep.subr.mxu0 0.0
    %346 = vmatpush1.xpose.msra.mxu0 %v306
    %347 = vmatprep.subr.mxu0 0.0
    %348 = vmatpush1.xpose.msra.mxu0 %v309
    %349 = vmatprep.subr.mxu0 0.0
    %350 = vmatpush1.xpose.msra.mxu0 %v312
    %351 = vmatprep.subr.mxu0 0.0
    %352 = vmatpush1.xpose.msra.mxu0 %v315
    %353 = vmatprep.subr.mxu0 0.0
    %354 = vmatpush1.xpose.msra.mxu0 %v318
    %355 = vmatprep.subr.mxu0 0.0
    %356 = vmatpush1.xpose.msra.mxu0 %v321
    %357 = vmatprep.subr.mxu0 0.0
    %358 = vmatpush1.xpose.msra.mxu0 %v324
    %359 = vmatprep.subr.mxu0 0.0
    %360 = vmatpush1.xpose.msra.mxu0 %v327
    %361 = vmatprep.subr.mxu0 0.0
    %362 = vmatpush1.xpose.msra.mxu0 0.0
    %363 = vmatprep.subr.mxu0 0.0
    %364 = vmatpush1.xpose.msra.mxu0 0.0
    %365 = vmatprep.subr.mxu0 0.0
    %366 = vmatpush1.xpose.msra.mxu0 0.0
    %367 = vmatprep.subr.mxu0 0.0
    %368 = vmatpush1.xpose.msra.mxu0 0.0
    %369 = vmatprep.subr.mxu0 0.0
    %370 = vmatpush1.xpose.msra.mxu0 0.0
    %371 = vmatprep.subr.mxu0 0.0
    %372 = vmatpush1.xpose.msra.mxu0 0.0
    %373 = vmatprep.subr.mxu0 0.0
    %374 = vmatpush1.xpose.msra.mxu0 0.0
    %375 = vmatprep.subr.mxu0 0.0
    %376 = vmatpush1.xpose.msra.mxu0 0.0
    %377 = vmatprep.subr.mxu0 0.0
    %378 = vmatpush1.xpose.msra.mxu0 0.0
    %379 = vmatprep.subr.mxu0 0.0
    %380 = vmatpush1.xpose.msra.mxu0 0.0
    %381 = vmatprep.subr.mxu0 0.0
    %382 = vmatpush1.xpose.msra.mxu0 0.0
    %383 = vmatprep.subr.mxu0 0.0
    %384 = vmatpush1.xpose.msra.mxu0 0.0
    %385 = vmatprep.subr.mxu0 0.0
    %386 = vmatpush1.xpose.msra.mxu0 0.0
    %387 = vmatprep.subr.mxu0 0.0
    %388 = vmatpush1.xpose.msra.mxu0 0.0
    %389 = vmatprep.subr.mxu0 0.0
    %390 = vmatpush1.xpose.msra.mxu0 0.0
    %391 = vmatprep.subr.mxu0 0.0
    %392 = vmatpush1.xpose.msra.mxu0 0.0
    %393 = vmatprep.mubr.f32.mxu0 0.0
    %394 = vmatmul.mubr.f32.gmra.mrb[0].mxu0 %v270
    %v395 = vpop.f32.mrb[0].mxu0
    %v396 = vadd.f32 %v250, %v395
    %v397 = vpop.f32.mrb[0].mxu0
    %398 = vmatprep.mubr.f32.mxu0 0.0
    %399 = vmatmul.mubr.f32.gmra.mrb[0].mxu0 %v273
    %v400 = vpop.f32.mrb[0].mxu0
    %v401 = vadd.f32 %v255, %v400
    %v402 = vpop.f32.mrb[0].mxu0
    %403 = vmatprep.mubr.f32.mxu0 0.0
    %404 = vmatmul.mubr.f32.gmra.mrb[0].mxu0 %v276
    %v405 = vpop.f32.mrb[0].mxu0
    %v406 = vadd.f32 %v260, %v405
    %v407 = vpop.f32.mrb[0].mxu0
    %408 = vmatprep.mubr.f32.mxu0 0.0
    %409 = vmatmul.mubr.f32.gmra.mrb[0].mxu0 %v279
    %v410 = vpop.f32.mrb[0].mxu0
    %v411 = vadd.f32 %v265, %v410
    %v412 = vpop.f32.mrb[0].mxu0
    %413 = vdwg.mxu0
    %v414 = vld [vmem:[#allocation7] sm:$0xff]
    %v415 = vld [vmem:[#allocation7 + $0x8] sm:$0xff]
    %v416 = vld [vmem:[#allocation7 + $0x10] sm:$0xff]
    %v417 = vld [vmem:[#allocation7 + $0x18] sm:$0xff]
    %419 = vset.pattern.permute.xlu0 0
    %420 = vperm.xlu0 %419, %v414
    %v421 = vpop.permute.xlu0 %420
    %424 = vset.pattern.permute.xlu0 0
    %425 = vperm.xlu0 %424, %v415
    %v426 = vpop.permute.xlu0 %425
    %429 = vset.pattern.permute.xlu0 0
    %430 = vperm.xlu0 %429, %v416
    %v431 = vpop.permute.xlu0 %430
    %434 = vset.pattern.permute.xlu0 0
    %435 = vperm.xlu0 %434, %v417
    %v436 = vpop.permute.xlu0 %435
    %v438 = vadd.f32 %v396, %v421
    %v439 = vadd.f32 %v401, %v426
    %v440 = vadd.f32 %v406, %v431
    %v441 = vadd.f32 %v411, %v436
    %v442 = vmax.f32 %v438, 0.0
    %v443 = vmax.f32 %v439, 0.0
    %v444 = vmax.f32 %v440, 0.0
    %v445 = vmax.f32 %v441, 0.0
    %v446 = vld [vmem:[#allocation8] sm:$0xff]
    %v447 = vld [vmem:[#allocation8 + $0x8] sm:$0xff]
    %v448 = vld [vmem:[#allocation8 + $0x10] sm:$0xff]
    %v449 = vld [vmem:[#allocation8 + $0x18] sm:$0xff]
    %451 = vset.pattern.permute.xlu0 0
    %452 = vperm.xlu0 %451, %v446
    %v453 = vpop.permute.xlu0 %452
    %456 = vset.pattern.permute.xlu0 0
    %457 = vperm.xlu0 %456, %v447
    %v458 = vpop.permute.xlu0 %457
    %461 = vset.pattern.permute.xlu0 0
    %462 = vperm.xlu0 %461, %v448
    %v463 = vpop.permute.xlu0 %462
    %466 = vset.pattern.permute.xlu0 0
    %467 = vperm.xlu0 %466, %v449
    %v468 = vpop.permute.xlu0 %467
    %v470 = vmul.f32 %v442, %v453
    %v471 = vmul.f32 %v443, %v458
    %v472 = vmul.f32 %v444, %v463
    %v473 = vmul.f32 %v445, %v468
    %v474 = vadd.f32 %v470, %v471
    %v475 = vadd.f32 %v474, %v472
    %v476 = vadd.f32 %v475, %v473
    %v477 = vrot.slane %v476, 4
    %v478 = vadd.f32 %v476, %v477
    %v479 = vrot.slane %v478, 2
    %v480 = vadd.f32 %v478, %v479
    %v481 = vrot.slane %v480, 1
    %v482 = vadd.f32 %v480, %v481
    %s483 = sld [smem:[#allocation2]]
    %v484 = vstv %s483
    %v485 = vadd.f32 %v482, %v484
    %486 = vst [vmem:[%s7] sm:$0x1] %v485
    // Predicated region
    $region46: #{_lambda_.1} parent=1 // pred_check
      _
    $region47: #{_lambda_.1} parent=1 // pred_check_branch
      %488 = sbr.rel (0) target = $region49
    $region48: #{_lambda_.1} parent=1 // pred_region
      _
    $region49: #{_lambda_.1} parent=1 // pred_fallthru
      _
    // Predicated region
    $region50: #{_lambda_.1} parent=1 // pred_check
      _
    $region51: #{_lambda_.1} parent=1 // pred_check_branch
      %490 = sbr.rel (0) target = $region53
    $region52: #{_lambda_.1} parent=1 // pred_region
      _
    $region53: #{_lambda_.1} parent=1 // pred_fallthru
      _
    %491 = vsyncpa [#allocation4], 1
    %492 = vsyncpa [#allocation6], 1
    %493 = vsyncpa [#allocation9], 1

</llo_original>
